<compile_context>
chip_gen: v7x
topology: tpu7x:2x2x1
jax: 0.10.0
libtpu: 0.0.40
codegen_flags: <defaults>
</compile_context>

<pallas_src>
import jax
import jax.numpy as jnp
from jax import lax
from jax.experimental import pallas as pl
from jax.experimental.pallas import tpu as pltpu

EPS = 1e-5


# ----------------------------------------------------------------------------- kernels
def _fused_kernel(e1_ref, e2_ref, w1_ref, w2_ref,
                  g1_ref, bb1_ref, g2_ref, bb2_ref, w3_ref, b3_ref,
                  out_ref, x_stage):
    """Single-block path: whole batch resident in VMEM, no scratch round-trip."""
    emb = e1_ref.shape[1]

    # Fused fc1: stage e1/e2 into adjacent lane halves, one K=2*emb matmul.
    x_stage[:, :emb] = e1_ref[...]
    x_stage[:, emb:] = e2_ref[...]
    h1 = jnp.dot(x_stage[...], w1_ref[...], preferred_element_type=jnp.float32)

    # BN1 (training mode, biased var); fc1 bias cancelled by mean subtraction.
    m1 = jnp.mean(h1, axis=0, keepdims=True)
    c1 = h1 - m1
    v1 = jnp.mean(c1 * c1, axis=0, keepdims=True)
    a1 = jnp.maximum(g1_ref[...] * c1 * lax.rsqrt(v1 + EPS) + bb1_ref[...], 0.0)

    # fc2 (bias cancelled by BN2); bf16 MXU operands, f32 accumulation.
    h2 = jnp.dot(a1.astype(jnp.bfloat16), w2_ref[...],
                 preferred_element_type=jnp.float32)
    m2 = jnp.mean(h2, axis=0, keepdims=True)
    c2 = h2 - m2
    v2 = jnp.mean(c2 * c2, axis=0, keepdims=True)
    a2 = jnp.maximum(g2_ref[...] * c2 * lax.rsqrt(v2 + EPS) + bb2_ref[...], 0.0)

    # Output layer: VPU multiply + lane reduce (skip an N=1 MXU matmul).
    out_ref[...] = jnp.sum(a2 * w3_ref[...], axis=-1, keepdims=True) + b3_ref[...]


def _streamed_kernel(e1_ref, e2_ref, w1_ref, w2_ref,
                     g1_ref, bb1_ref, g2_ref, bb2_ref, w3_ref, b3_ref,
                     out_ref,
                     x_stage, h1_acc, h2_acc, s1_sum, s1_sq, s2_sum, s2_sq):
    """Batch-streamed path: fc1 + BN1 stat accumulation per grid step,
    tiled BN1/fc2/BN2/out epilogue at the last step."""
    t = pl.program_id(0)
    nt = pl.num_programs(0)
    tile_b = e1_ref.shape[0]
    emb = e1_ref.shape[1]
    bsz = h1_acc.shape[0]
    num_chunks = bsz // tile_b
    align = tile_b & -tile_b          # largest power-of-2 divisor, for pl.multiple_of

    @pl.when(t == 0)
    def _():
        s1_sum[...] = jnp.zeros_like(s1_sum)
        s1_sq[...] = jnp.zeros_like(s1_sq)

    # ---- streamed phase: fused fc1 on this batch tile -------------------------
    x_stage[:, :emb] = e1_ref[...]
    x_stage[:, emb:] = e2_ref[...]
    h1_t = jnp.dot(x_stage[...], w1_ref[...], preferred_element_type=jnp.float32)

    row0 = pl.multiple_of(t * tile_b, align)
    h1_acc[pl.ds(row0, tile_b), :] = h1_t
    # Incremental BN1 statistics (VPU work, hidden behind next tile's DMA/MXU).
    s1_sum[...] += jnp.sum(h1_t, axis=0, keepdims=True)
    s1_sq[...] += jnp.sum(h1_t * h1_t, axis=0, keepdims=True)

    # ---- finalize: tiled BN1-normalize + fc2, then tiled BN2 + output ----------
    @pl.when(t == nt - 1)
    def _finalize():
        inv_b = 1.0 / bsz
        m1 = s1_sum[...] * inv_b
        v1 = jnp.maximum(s1_sq[...] * inv_b - m1 * m1, 0.0)   # biased var, E[x^2]-E[x]^2
        scale1 = g1_ref[...] * lax.rsqrt(v1 + EPS)
        shift1 = bb1_ref[...] - m1 * scale1

        s2_sum[...] = jnp.zeros_like(s2_sum)
        s2_sq[...] = jnp.zeros_like(s2_sq)
        unroll = num_chunks <= 8

        def fc2_chunk(c, carry):
            r0 = pl.multiple_of(c * tile_b, align)
            a1_c = jnp.maximum(scale1 * h1_acc[pl.ds(r0, tile_b), :] + shift1, 0.0)
            h2_c = jnp.dot(a1_c.astype(jnp.bfloat16), w2_ref[...],
                           preferred_element_type=jnp.float32)
            h2_acc[pl.ds(r0, tile_b), :] = h2_c
            s2_sum[...] += jnp.sum(h2_c, axis=0, keepdims=True)
            s2_sq[...] += jnp.sum(h2_c * h2_c, axis=0, keepdims=True)
            return carry

        lax.fori_loop(0, num_chunks, fc2_chunk, 0, unroll=unroll)

        m2 = s2_sum[...] * inv_b
        v2 = jnp.maximum(s2_sq[...] * inv_b - m2 * m2, 0.0)
        scale2 = g2_ref[...] * lax.rsqrt(v2 + EPS)
        shift2 = bb2_ref[...] - m2 * scale2

        def out_chunk(c, carry):
            r0 = pl.multiple_of(c * tile_b, align)
            a2_c = jnp.maximum(scale2 * h2_acc[pl.ds(r0, tile_b), :] + shift2, 0.0)
            out_ref[pl.ds(r0, tile_b), :] = (
                jnp.sum(a2_c * w3_ref[...], axis=-1, keepdims=True) + b3_ref[...])
            return carry

        lax.fori_loop(0, num_chunks, out_chunk, 0, unroll=unroll)


# ----------------------------------------------------------------------------- VMEM budget
def _vmem_weight_bytes(emb, H1, H2):
    return (2 * emb * H1 + H1 * H2) * 2 + (2 * H1 + 2 * H2 + H2 + 1) * 4


def _vmem_fused_bytes(B, emb, H1, H2):
    weights = 2 * _vmem_weight_bytes(emb, H1, H2)      # conservatively double-buffered
    acts = B * (2 * emb * 2          # e1 + e2 input blocks (bf16)
                + 2 * emb * 2        # x_stage (bf16)
                + 2 * H1 * 4         # h1 + a1 (f32)
                + H1 * 2             # a1 bf16 cast
                + 2 * H2 * 4         # h2 + a2 (f32)
                + 4)                 # out block (f32)
    return weights + acts + (1 << 20)


def _vmem_streamed_bytes(B, emb, H1, H2, tile_b):
    weights = 2 * _vmem_weight_bytes(emb, H1, H2)
    resident = B * (H1 * 4 + H2 * 4 + 4) + (2 * H1 + 2 * H2) * 4   # h1_acc, h2_acc, out, stats
    streamed = 2 * 2 * tile_b * emb * 2                            # double-buffered e1/e2 tiles
    temps = tile_b * (2 * emb * 2 + 2 * H1 * 4 + H1 * 2 + 2 * H2 * 4)
    return weights + resident + streamed + temps + (1 << 20)


def _vmem_budget_bytes():
    try:
        cap = int(pltpu.get_tpu_info().vmem_capacity_bytes)
    except Exception:
        cap = 64 << 20      # v7x physical per-TensorCore VMEM (smallest across v5e/v6e/v7x)
    return (cap * 3) // 4   # headroom for Mosaic-internal scratch


def _pick_tile_b(B, emb, H1, H2, budget):
    """Largest multiple-of-16 tile that divides B and fits the VMEM budget."""
    divisors = [c for c in (1024, 512, 256, 128, 64, 32, 16) if c <= B and B % c == 0]
    for cand in divisors:
        if _vmem_streamed_bytes(B, emb, H1, H2, cand) <= budget:
            return cand
    # TODO(synk): if even the smallest tile blows the budget (huge B), stage h1/h2
    # through HBM with a two-pass (stats -> normalize) pipeline instead of resident scratch.
    return divisors[-1] if divisors else B


# ----------------------------------------------------------------------------- wrapper
def pair_classifier(e1, e2, params, *, tile_b=None, force_streamed=False):
    B, emb = e1.shape
    H1 = params["w1"].shape[1]
    H2 = params["w2"].shape[1]
    assert params["w1"].shape[0] == 2 * emb

    budget = _vmem_budget_bytes()
    e1b = e1.astype(jnp.bfloat16)
    e2b = e2.astype(jnp.bfloat16)
    weight_args = (params["w1"], params["w2"], params["g1"], params["bb1"],
                   params["g2"], params["bb2"], params["w3"], params["b3"])

    use_streamed = (force_streamed or tile_b is not None
                    or _vmem_fused_bytes(B, emb, H1, H2) > budget)

    const = lambda t: (0, 0)
    weight_specs = [
        pl.BlockSpec((2 * emb, H1), const),   # w1 (fused)
        pl.BlockSpec((H1, H2), const),        # w2
        pl.BlockSpec((1, H1), const),         # g1
        pl.BlockSpec((1, H1), const),         # bb1
        pl.BlockSpec((1, H2), const),         # g2
        pl.BlockSpec((1, H2), const),         # bb2
        pl.BlockSpec((1, H2), const),         # w3 (row form)
        pl.BlockSpec((1, 1), const),          # b3
    ]
    out_spec = pl.BlockSpec((B, 1), const)    # narrow output: one masked vst, tiny VMEM

    if not use_streamed:
        # Gridless fast path: whole batch in one block, no scratch round-trip.
        out = pl.pallas_call(
            _fused_kernel,
            out_shape=jax.ShapeDtypeStruct((B, 1), jnp.float32),
            grid_spec=pltpu.PrefetchScalarGridSpec(
                num_scalar_prefetch=0,
                grid=(1,),
                in_specs=[pl.BlockSpec((B, emb), const),
                          pl.BlockSpec((B, emb), const)] + weight_specs,
                out_specs=out_spec,
                scratch_shapes=[pltpu.VMEM((B, 2 * emb), jnp.bfloat16)]),
            compiler_params=pltpu.CompilerParams(
                dimension_semantics=("arbitrary",),
                vmem_limit_bytes=budget),
        )(e1b, e2b, *weight_args)
        return out[:, 0]

    if tile_b is None:
        tile_b = _pick_tile_b(B, emb, H1, H2, budget)
    assert B % tile_b == 0 and (tile_b % 16 == 0 or tile_b == B), (B, tile_b)
    num_tiles = B // tile_b
    tiled = lambda t: (t, 0)

    out = pl.pallas_call(
        _streamed_kernel,
        out_shape=jax.ShapeDtypeStruct((B, 1), jnp.float32),
        grid_spec=pltpu.PrefetchScalarGridSpec(
            num_scalar_prefetch=0,
            grid=(num_tiles,),
            in_specs=[pl.BlockSpec((tile_b, emb), tiled),
                      pl.BlockSpec((tile_b, emb), tiled)] + weight_specs,
            out_specs=out_spec,
            scratch_shapes=[
                pltpu.VMEM((tile_b, 2 * emb), jnp.bfloat16),   # x_stage (fused fc1 input)
                pltpu.VMEM((B, H1), jnp.float32),              # h1_acc (full-batch fc1 output)
                pltpu.VMEM((B, H2), jnp.float32),              # h2_acc (full-batch fc2 output)
                pltpu.VMEM((1, H1), jnp.float32),              # s1_sum
                pltpu.VMEM((1, H1), jnp.float32),              # s1_sq
                pltpu.VMEM((1, H2), jnp.float32),              # s2_sum
                pltpu.VMEM((1, H2), jnp.float32),              # s2_sq
            ]),
        # "arbitrary": BatchNorm needs full-batch statistics, so the batch axis must
        # stay sequential on a single TensorCore.
        compiler_params=pltpu.CompilerParams(
            dimension_semantics=("arbitrary",),
            vmem_limit_bytes=budget),
    )(e1b, e2b, *weight_args)
    return out[:, 0]


# ----------------------------------------------------------------------------- params / reference
def init_params(key, emb_dim, hidden_dim):
    """Deterministic synthetic parameters.

    Returns (kernel_params, ref_params): kernel params are pre-transposed / bf16-cast
    for the Pallas kernels; ref params keep PyTorch layout in f32.
    """
    ks = jax.random.split(key, 6)
    in1, h1, h2 = emb_dim * 2, hidden_dim, hidden_dim // 2

    def linear(kw, kb, fan_in, fan_out):
        bound = 1.0 / (fan_in ** 0.5)
        w = jax.random.uniform(kw, (fan_out, fan_in), jnp.float32, -bound, bound)  # (out, in)
        b = jax.random.uniform(kb, (fan_out,), jnp.float32, -bound, bound)
        return w, b

    w1, b1 = linear(ks[0], ks[1], in1, h1)
    w2, b2 = linear(ks[2], ks[3], h1, h2)
    w3, b3 = linear(ks[4], ks[5], h2, 1)

    g1 = jnp.ones((h1,), jnp.float32)
    bb1 = jnp.zeros((h1,), jnp.float32)
    g2 = jnp.ones((h2,), jnp.float32)
    bb2 = jnp.zeros((h2,), jnp.float32)

    ref_params = dict(w1=w1, b1=b1, w2=w2, b2=b2, w3=w3, b3=b3,
                      g1=g1, bb1=bb1, g2=g2, bb2=bb2)

    kernel_params = dict(
        w1=w1.T.astype(jnp.bfloat16),             # (2*emb, h1) full fc1 weight (fused K)
        w2=w2.T.astype(jnp.bfloat16),             # (h1, h2)
        g1=g1.reshape(1, h1), bb1=bb1.reshape(1, h1),
        g2=g2.reshape(1, h2), bb2=bb2.reshape(1, h2),
        w3=w3.reshape(1, h2),                     # row form for VPU mul + lane reduce
        b3=b3.reshape(1, 1),
    )
    return kernel_params, ref_params


def reference(e1, e2, p):
    """Pure-JAX f32 reference with exact PyTorch (training-mode) semantics."""
    x = jnp.concatenate([e1, e2], axis=1)

    def bn_relu(h, g, b):
        m = jnp.mean(h, axis=0, keepdims=True)
        v = jnp.mean((h - m) ** 2, axis=0, keepdims=True)
        return jnp.maximum(g * (h - m) / jnp.sqrt(v + EPS) + b, 0.0)

    h = bn_relu(x @ p["w1"].T + p["b1"], p["g1"], p["bb1"])
    h = bn_relu(h @ p["w2"].T + p["b2"], p["g2"], p["bb2"])
    return (h @ p["w3"].T + p["b3"])[:, 0]


if __name__ == "__main__":
    # Small shapes consistent with the module: emb_dim -> 2*emb_dim -> hidden -> hidden//2 -> 1
    B, EMB_DIM, HIDDEN_DIM = 128, 64, 64

    key = jax.random.PRNGKey(0)
    k1, k2, kp = jax.random.split(key, 3)
    e1 = jax.random.normal(k1, (B, EMB_DIM), jnp.float32)
    e2 = jax.random.normal(k2, (B, EMB_DIM), jnp.float32)
    kernel_params, ref_params = init_params(kp, EMB_DIM, HIDDEN_DIM)
    ref = reference(e1, e2, ref_params)

    # Default path (gridless single-block for these shapes).
    out_fused = jax.block_until_ready(pair_classifier(e1, e2, kernel_params))
    # Forced streamed path (4 batch tiles) to exercise the grid + tiled epilogue.
    out_streamed = jax.block_until_ready(
        pair_classifier(e1, e2, kernel_params, tile_b=32, force_streamed=True))

    for name, out in (("fused", out_fused), ("streamed", out_streamed)):
        assert out.shape == (B,), (name, out.shape)
        max_err = jnp.max(jnp.abs(out - ref))
        # bf16 matmul operands (f32 accumulation / f32 BN) -> loose tolerance vs f32 reference.
        assert jnp.allclose(out, ref, atol=5e-2, rtol=5e-2), (name, max_err, out[:4], ref[:4])

    print("KERNEL_OK")
</pallas_src>

<mosaic_0001>
module attributes {stable_mosaic.version = 11 : i64} {
  func.func @_fused_kernel(%arg0: i32, %arg1: memref<128x64xbf16, #tpu.memory_space<vmem>>, %arg2: memref<128x64xbf16, #tpu.memory_space<vmem>>, %arg3: memref<128x64xbf16, #tpu.memory_space<vmem>>, %arg4: memref<64x32xbf16, #tpu.memory_space<vmem>>, %arg5: memref<1x64xf32, #tpu.memory_space<vmem>>, %arg6: memref<1x64xf32, #tpu.memory_space<vmem>>, %arg7: memref<1x32xf32, #tpu.memory_space<vmem>>, %arg8: memref<1x32xf32, #tpu.memory_space<vmem>>, %arg9: memref<1x32xf32, #tpu.memory_space<vmem>>, %arg10: memref<1x1xf32, #tpu.memory_space<vmem>>, %arg11: memref<128x1xf32, #tpu.memory_space<vmem>>, %arg12: memref<128x128xbf16, #tpu.memory_space<vmem>>) attributes {dimension_semantics = [#tpu.dimension_semantics<arbitrary>], iteration_bounds = array<i64: 1>, scalar_prefetch = 0 : i64, scratch_operands = 1 : i64, tpu.core_type = #tpu.core_type<tc>, window_params = [{pipeline_mode = #tpu.pipeline_mode<synchronous>, transform_indices = @transform_0, window_bounds = array<i64: 128, 64>}, {pipeline_mode = #tpu.pipeline_mode<synchronous>, transform_indices = @transform_1, window_bounds = array<i64: 128, 64>}, {pipeline_mode = #tpu.pipeline_mode<synchronous>, transform_indices = @transform_2, window_bounds = array<i64: 128, 64>}, {pipeline_mode = #tpu.pipeline_mode<synchronous>, transform_indices = @transform_3, window_bounds = array<i64: 64, 32>}, {pipeline_mode = #tpu.pipeline_mode<synchronous>, transform_indices = @transform_4, window_bounds = array<i64: 1, 64>}, {pipeline_mode = #tpu.pipeline_mode<synchronous>, transform_indices = @transform_5, window_bounds = array<i64: 1, 64>}, {pipeline_mode = #tpu.pipeline_mode<synchronous>, transform_indices = @transform_6, window_bounds = array<i64: 1, 32>}, {pipeline_mode = #tpu.pipeline_mode<synchronous>, transform_indices = @transform_7, window_bounds = array<i64: 1, 32>}, {pipeline_mode = #tpu.pipeline_mode<synchronous>, transform_indices = @transform_8, window_bounds = array<i64: 1, 32>}, {pipeline_mode = #tpu.pipeline_mode<synchronous>, transform_indices = @transform_9, window_bounds = array<i64: 1, 1>}, {pipeline_mode = #tpu.pipeline_mode<synchronous>, transform_indices = @transform_10, window_bounds = array<i64: 128, 1>}]} {
    %c0 = arith.constant 0 : index
    %c0_0 = arith.constant 0 : index
    %0 = vector.load %arg1[%c0, %c0_0] : memref<128x64xbf16, #tpu.memory_space<vmem>>, vector<128x64xbf16>
    %c0_1 = arith.constant 0 : index
    %c0_2 = arith.constant 0 : index
    %1 = vector.load %arg12[%c0_1, %c0_2] : memref<128x128xbf16, #tpu.memory_space<vmem>>, vector<128x64xbf16>
    tpu.vector_store %arg12[%c0_1, %c0_2], %0 {strides = array<i32>} : memref<128x128xbf16, #tpu.memory_space<vmem>>, vector<128x64xbf16>,
    %c0_3 = arith.constant 0 : index
    %c0_4 = arith.constant 0 : index
    %2 = vector.load %arg2[%c0_3, %c0_4] : memref<128x64xbf16, #tpu.memory_space<vmem>>, vector<128x64xbf16>
    %c0_5 = arith.constant 0 : index
    %c64 = arith.constant 64 : index
    %3 = vector.load %arg12[%c0_5, %c64] : memref<128x128xbf16, #tpu.memory_space<vmem>>, vector<128x64xbf16>
    tpu.vector_store %arg12[%c0_5, %c64], %2 {strides = array<i32>} : memref<128x128xbf16, #tpu.memory_space<vmem>>, vector<128x64xbf16>,
    %c0_6 = arith.constant 0 : index
    %c0_7 = arith.constant 0 : index
    %4 = vector.load %arg12[%c0_6, %c0_7] : memref<128x128xbf16, #tpu.memory_space<vmem>>, vector<128x128xbf16>
    %c0_8 = arith.constant 0 : index
    %c0_9 = arith.constant 0 : index
    %5 = vector.load %arg3[%c0_8, %c0_9] : memref<128x64xbf16, #tpu.memory_space<vmem>>, vector<128x64xbf16>
    %cst = arith.constant dense<0.000000e+00> : vector<128x64xf32>
    %6 = tpu.matmul %4, %5, %cst {dimension_numbers = #tpu.dot_dimension_numbers<[1], [0], [0], [1], [0, 0, 1, 1], [], []>} : vector<128x128xbf16>, vector<128x64xbf16>, vector<128x64xf32> -> vector<128x64xf32>
    %cst_10 = arith.constant dense<0.000000e+00> : vector<64xf32>
    %7 = vector.multi_reduction <add>, %6, %cst_10 [0] : vector<128x64xf32> to vector<64xf32>
    %8 = vector.shape_cast %7 : vector<64xf32> to vector<1x64xf32>
    %cst_11 = arith.constant 1.280000e+02 : f32
    %9 = vector.broadcast %cst_11 : f32 to vector<1x64xf32>
    %10 = arith.divf %8, %9 : vector<1x64xf32>
    %11 = vector.broadcast %10 : vector<1x64xf32> to vector<128x64xf32>
    %12 = arith.subf %6, %11 : vector<128x64xf32>
    %13 = arith.mulf %12, %12 : vector<128x64xf32>
    %cst_12 = arith.constant dense<0.000000e+00> : vector<64xf32>
    %14 = vector.multi_reduction <add>, %13, %cst_12 [0] : vector<128x64xf32> to vector<64xf32>
    %15 = vector.shape_cast %14 : vector<64xf32> to vector<1x64xf32>
    %cst_13 = arith.constant 1.280000e+02 : f32
    %16 = vector.broadcast %cst_13 : f32 to vector<1x64xf32>
    %17 = arith.divf %15, %16 : vector<1x64xf32>
    %c0_14 = arith.constant 0 : index
    %c0_15 = arith.constant 0 : index
    %18 = vector.load %arg5[%c0_14, %c0_15] : memref<1x64xf32, #tpu.memory_space<vmem>>, vector<1x64xf32>
    %19 = vector.broadcast %18 : vector<1x64xf32> to vector<128x64xf32>
    %20 = arith.mulf %19, %12 : vector<128x64xf32>
    %cst_16 = arith.constant 9.99999974E-6 : f32
    %21 = vector.broadcast %cst_16 : f32 to vector<1x64xf32>
    %22 = arith.addf %17, %21 : vector<1x64xf32>
    %23 = math.rsqrt %22 : vector<1x64xf32>
    %24 = vector.broadcast %23 : vector<1x64xf32> to vector<128x64xf32>
    %25 = arith.mulf %20, %24 : vector<128x64xf32>
    %c0_17 = arith.constant 0 : index
    %c0_18 = arith.constant 0 : index
    %26 = vector.load %arg6[%c0_17, %c0_18] : memref<1x64xf32, #tpu.memory_space<vmem>>, vector<1x64xf32>
    %27 = vector.broadcast %26 : vector<1x64xf32> to vector<128x64xf32>
    %28 = arith.addf %25, %27 : vector<128x64xf32>
    %cst_19 = arith.constant 0.000000e+00 : f32
    %29 = vector.broadcast %cst_19 : f32 to vector<128x64xf32>
    %30 = arith.maximumf %28, %29 : vector<128x64xf32>
    %31 = arith.truncf %30 : vector<128x64xf32> to vector<128x64xbf16>
    %c0_20 = arith.constant 0 : index
    %c0_21 = arith.constant 0 : index
    %32 = vector.load %arg4[%c0_20, %c0_21] : memref<64x32xbf16, #tpu.memory_space<vmem>>, vector<64x32xbf16>
    %cst_22 = arith.constant dense<0.000000e+00> : vector<128x32xf32>
    %33 = tpu.matmul %31, %32, %cst_22 {dimension_numbers = #tpu.dot_dimension_numbers<[1], [0], [0], [1], [0, 0, 1, 1], [], []>} : vector<128x64xbf16>, vector<64x32xbf16>, vector<128x32xf32> -> vector<128x32xf32>
    %cst_23 = arith.constant dense<0.000000e+00> : vector<32xf32>
    %34 = vector.multi_reduction <add>, %33, %cst_23 [0] : vector<128x32xf32> to vector<32xf32>
    %35 = vector.shape_cast %34 : vector<32xf32> to vector<1x32xf32>
    %cst_24 = arith.constant 1.280000e+02 : f32
    %36 = vector.broadcast %cst_24 : f32 to vector<1x32xf32>
    %37 = arith.divf %35, %36 : vector<1x32xf32>
    %38 = vector.broadcast %37 : vector<1x32xf32> to vector<128x32xf32>
    %39 = arith.subf %33, %38 : vector<128x32xf32>
    %40 = arith.mulf %39, %39 : vector<128x32xf32>
    %cst_25 = arith.constant dense<0.000000e+00> : vector<32xf32>
    %41 = vector.multi_reduction <add>, %40, %cst_25 [0] : vector<128x32xf32> to vector<32xf32>
    %42 = vector.shape_cast %41 : vector<32xf32> to vector<1x32xf32>
    %cst_26 = arith.constant 1.280000e+02 : f32
    %43 = vector.broadcast %cst_26 : f32 to vector<1x32xf32>
    %44 = arith.divf %42, %43 : vector<1x32xf32>
    %c0_27 = arith.constant 0 : index
    %c0_28 = arith.constant 0 : index
    %45 = vector.load %arg7[%c0_27, %c0_28] : memref<1x32xf32, #tpu.memory_space<vmem>>, vector<1x32xf32>
    %46 = vector.broadcast %45 : vector<1x32xf32> to vector<128x32xf32>
    %47 = arith.mulf %46, %39 : vector<128x32xf32>
    %cst_29 = arith.constant 9.99999974E-6 : f32
    %48 = vector.broadcast %cst_29 : f32 to vector<1x32xf32>
    %49 = arith.addf %44, %48 : vector<1x32xf32>
    %50 = math.rsqrt %49 : vector<1x32xf32>
    %51 = vector.broadcast %50 : vector<1x32xf32> to vector<128x32xf32>
    %52 = arith.mulf %47, %51 : vector<128x32xf32>
    %c0_30 = arith.constant 0 : index
    %c0_31 = arith.constant 0 : index
    %53 = vector.load %arg8[%c0_30, %c0_31] : memref<1x32xf32, #tpu.memory_space<vmem>>, vector<1x32xf32>
    %54 = vector.broadcast %53 : vector<1x32xf32> to vector<128x32xf32>
    %55 = arith.addf %52, %54 : vector<128x32xf32>
    %cst_32 = arith.constant 0.000000e+00 : f32
    %56 = vector.broadcast %cst_32 : f32 to vector<128x32xf32>
    %57 = arith.maximumf %55, %56 : vector<128x32xf32>
    %c0_33 = arith.constant 0 : index
    %c0_34 = arith.constant 0 : index
    %58 = vector.load %arg9[%c0_33, %c0_34] : memref<1x32xf32, #tpu.memory_space<vmem>>, vector<1x32xf32>
    %59 = vector.broadcast %58 : vector<1x32xf32> to vector<128x32xf32>
    %60 = arith.mulf %57, %59 : vector<128x32xf32>
    %cst_35 = arith.constant dense<0.000000e+00> : vector<128xf32>
    %61 = vector.multi_reduction <add>, %60, %cst_35 [1] : vector<128x32xf32> to vector<128xf32>
    %62 = vector.shape_cast %61 : vector<128xf32> to vector<128x1xf32>
    %c0_36 = arith.constant 0 : index
    %c0_37 = arith.constant 0 : index
    %63 = vector.load %arg10[%c0_36, %c0_37] : memref<1x1xf32, #tpu.memory_space<vmem>>, vector<1x1xf32>
    %64 = vector.broadcast %63 : vector<1x1xf32> to vector<128x1xf32>
    %65 = arith.addf %62, %64 : vector<128x1xf32>
    %c0_38 = arith.constant 0 : index
    %c0_39 = arith.constant 0 : index
    %66 = vector.load %arg11[%c0_38, %c0_39] : memref<128x1xf32, #tpu.memory_space<vmem>>, vector<128x1xf32>
    tpu.vector_store %arg11[%c0_38, %c0_39], %65 {strides = array<i32>} : memref<128x1xf32, #tpu.memory_space<vmem>>, vector<128x1xf32>,
    return
  }
  func.func @transform_0(%arg0: i32) -> (i32, i32) {
    %c0_i32 = arith.constant 0 : i32
    %c0_i32_0 = arith.constant 0 : i32
    %c0_i32_1 = arith.constant 0 : i32
    return %c0_i32, %c0_i32_0 : i32, i32
  }
  func.func @transform_1(%arg0: i32) -> (i32, i32) {
    %c0_i32 = arith.constant 0 : i32
    %c0_i32_0 = arith.constant 0 : i32
    %c0_i32_1 = arith.constant 0 : i32
    return %c0_i32, %c0_i32_0 : i32, i32
  }
  func.func @transform_2(%arg0: i32) -> (i32, i32) {
    %c0_i32 = arith.constant 0 : i32
    %c0_i32_0 = arith.constant 0 : i32
    %c0_i32_1 = arith.constant 0 : i32
    return %c0_i32, %c0_i32_0 : i32, i32
  }
  func.func @transform_3(%arg0: i32) -> (i32, i32) {
    %c0_i32 = arith.constant 0 : i32
    %c0_i32_0 = arith.constant 0 : i32
    %c0_i32_1 = arith.constant 0 : i32
    return %c0_i32, %c0_i32_0 : i32, i32
  }
  func.func @transform_4(%arg0: i32) -> (i32, i32) {
    %c0_i32 = arith.constant 0 : i32
    %c0_i32_0 = arith.constant 0 : i32
    %c0_i32_1 = arith.constant 0 : i32
    return %c0_i32, %c0_i32_0 : i32, i32
  }
  func.func @transform_5(%arg0: i32) -> (i32, i32) {
    %c0_i32 = arith.constant 0 : i32
    %c0_i32_0 = arith.constant 0 : i32
    %c0_i32_1 = arith.constant 0 : i32
    return %c0_i32, %c0_i32_0 : i32, i32
  }
  func.func @transform_6(%arg0: i32) -> (i32, i32) {
    %c0_i32 = arith.constant 0 : i32
    %c0_i32_0 = arith.constant 0 : i32
    %c0_i32_1 = arith.constant 0 : i32
    return %c0_i32, %c0_i32_0 : i32, i32
  }
  func.func @transform_7(%arg0: i32) -> (i32, i32) {
    %c0_i32 = arith.constant 0 : i32
    %c0_i32_0 = arith.constant 0 : i32
    %c0_i32_1 = arith.constant 0 : i32
    return %c0_i32, %c0_i32_0 : i32, i32
  }
  func.func @transform_8(%arg0: i32) -> (i32, i32) {
    %c0_i32 = arith.constant 0 : i32
    %c0_i32_0 = arith.constant 0 : i32
    %c0_i32_1 = arith.constant 0 : i32
    return %c0_i32, %c0_i32_0 : i32, i32
  }
  func.func @transform_9(%arg0: i32) -> (i32, i32) {
    %c0_i32 = arith.constant 0 : i32
    %c0_i32_0 = arith.constant 0 : i32
    %c0_i32_1 = arith.constant 0 : i32
    return %c0_i32, %c0_i32_0 : i32, i32
  }
  func.func @transform_10(%arg0: i32) -> (i32, i32) {
    %c0_i32 = arith.constant 0 : i32
    %c0_i32_0 = arith.constant 0 : i32
    %c0_i32_1 = arith.constant 0 : i32
    return %c0_i32, %c0_i32_0 : i32, i32
  }
}

</mosaic_0001>

<llo_original>
// kernel: tpu_custom_call.1
$region0: #{tpu_custom_call.1}
  #allocation0 [shape = 'u32[]', space=smem, size = 0x4, offset = 0x4, fixed_abs, tag = 'smem constant byte address 0x4 - core index']
  #allocation1 [shape = 'u32[144,128]{1,0:T(1,128)}', space=vmem, size = 0x12000, scoped, tag = 'internal scratch']
  #allocation2 [shape = 'bf16[128,128]{1,0:T(16,128)(2,1)}', space=vmem, size = 0x8000, scoped, tag = 'scratch operand']
  #allocation3 [shape = 'f32[1,1]{1,0:T(1,128)S(1)}', space=vmem, size = 0x200, scoped, tag = 'scoped memory for tpu_custom_call.1']
  %s0 = inlined_call_operand.vmem [shape: bf16[128,64], index: 0, kind: input, shape index: {}]
  %s1 = inlined_call_operand.vmem [shape: bf16[128,64], index: 1, kind: input, shape index: {}]
  %s2 = inlined_call_operand.vmem [shape: bf16[128,64], index: 2, kind: input, shape index: {}]
  %s3 = inlined_call_operand.vmem [shape: bf16[64,32], index: 3, kind: input, shape index: {}]
  %s4 = inlined_call_operand.vmem [shape: f32[1,64], index: 4, kind: input, shape index: {}]
  %s5 = inlined_call_operand.vmem [shape: f32[1,64], index: 5, kind: input, shape index: {}]
  %s6 = inlined_call_operand.vmem [shape: f32[1,32], index: 6, kind: input, shape index: {}]
  %s7 = inlined_call_operand.vmem [shape: f32[1,32], index: 7, kind: input, shape index: {}]
  %s8 = inlined_call_operand.vmem [shape: f32[1,32], index: 8, kind: input, shape index: {}]
  %s9 = inlined_call_operand.<no memory space> [shape: f32[1,1], index: 9, kind: input, shape index: {}]
  %s10 = inlined_call_operand.vmem [shape: f32[128,1], index: 10, kind: output, shape index: {}]
  %s11 = sld [smem:[#allocation0]]
  $region50: #{tpu_custom_call.1} parent=0
    _
  %s13 = ssub.s32 1, %s11
  %s14 = scalar_select 0, %s13, %s11
  %v15 = vstv %s9
  %16 = vst [vmem:[#allocation3] sm:$0x1] %v15
  // Predicated region
  $region2: #{tpu_custom_call.1} parent=0 // pred_check
    _
  $region3: #{tpu_custom_call.1} parent=0 // pred_check_branch
    %18 = sbr.rel (0) target = $region5
  $region4: #{tpu_custom_call.1} parent=0 // pred_region
    _
  $region5: #{tpu_custom_call.1} parent=0 // pred_fallthru
    _
  // Predicated region
  $region6: #{tpu_custom_call.1} parent=0 // pred_check
    _
  $region7: #{tpu_custom_call.1} parent=0 // pred_check_branch
    %20 = sbr.rel (0) target = $region9
  $region8: #{tpu_custom_call.1} parent=0 // pred_region
    _
  $region9: #{tpu_custom_call.1} parent=0 // pred_fallthru
    _
  // Predicated region
  $region10: #{tpu_custom_call.1} parent=0 // pred_check
    _
  $region11: #{tpu_custom_call.1} parent=0 // pred_check_branch
    %22 = sbr.rel (0) target = $region13
  $region12: #{tpu_custom_call.1} parent=0 // pred_region
    _
  $region13: #{tpu_custom_call.1} parent=0 // pred_fallthru
    _
  // Predicated region
  $region14: #{tpu_custom_call.1} parent=0 // pred_check
    _
  $region15: #{tpu_custom_call.1} parent=0 // pred_check_branch
    %24 = sbr.rel (0) target = $region17
  $region16: #{tpu_custom_call.1} parent=0 // pred_region
    _
  $region17: #{tpu_custom_call.1} parent=0 // pred_fallthru
    _
  // Predicated region
  $region18: #{tpu_custom_call.1} parent=0 // pred_check
    _
  $region19: #{tpu_custom_call.1} parent=0 // pred_check_branch
    %26 = sbr.rel (0) target = $region21
  $region20: #{tpu_custom_call.1} parent=0 // pred_region
    _
  $region21: #{tpu_custom_call.1} parent=0 // pred_fallthru
    _
  // Predicated region
  $region22: #{tpu_custom_call.1} parent=0 // pred_check
    _
  $region23: #{tpu_custom_call.1} parent=0 // pred_check_branch
    %28 = sbr.rel (0) target = $region25
  $region24: #{tpu_custom_call.1} parent=0 // pred_region
    _
  $region25: #{tpu_custom_call.1} parent=0 // pred_fallthru
    _
  // Predicated region
  $region26: #{tpu_custom_call.1} parent=0 // pred_check
    _
  $region27: #{tpu_custom_call.1} parent=0 // pred_check_branch
    %30 = sbr.rel (0) target = $region29
  $region28: #{tpu_custom_call.1} parent=0 // pred_region
    _
  $region29: #{tpu_custom_call.1} parent=0 // pred_fallthru
    _
  // Predicated region
  $region30: #{tpu_custom_call.1} parent=0 // pred_check
    _
  $region31: #{tpu_custom_call.1} parent=0 // pred_check_branch
    %32 = sbr.rel (0) target = $region33
  $region32: #{tpu_custom_call.1} parent=0 // pred_region
    _
  $region33: #{tpu_custom_call.1} parent=0 // pred_fallthru
    _
  // Predicated region
  $region34: #{tpu_custom_call.1} parent=0 // pred_check
    _
  $region35: #{tpu_custom_call.1} parent=0 // pred_check_branch
    %34 = sbr.rel (0) target = $region37
  $region36: #{tpu_custom_call.1} parent=0 // pred_region
    _
  $region37: #{tpu_custom_call.1} parent=0 // pred_fallthru
    _
  // Predicated region
  $region38: #{tpu_custom_call.1} parent=0 // pred_check
    _
  $region39: #{tpu_custom_call.1} parent=0 // pred_check_branch
    %36 = sbr.rel (0) target = $region41
  $region40: #{tpu_custom_call.1} parent=0 // pred_region
    _
  $region41: #{tpu_custom_call.1} parent=0 // pred_fallthru
    _
  %v38 = vld [vmem:[%s0] sm:$0xf]
  %v39 = vld [vmem:[%s0 + $0x4] sm:$0xf]
  %v40 = vld [vmem:[%s0 + $0x8] sm:$0xf]
  %v41 = vld [vmem:[%s0 + $0xc] sm:$0xf]
  %v42 = vld [vmem:[%s0 + $0x10] sm:$0xf]
  %v43 = vld [vmem:[%s0 + $0x14] sm:$0xf]
  %v44 = vld [vmem:[%s0 + $0x18] sm:$0xf]
  %v45 = vld [vmem:[%s0 + $0x1c] sm:$0xf]
  %v46 = vld [vmem:[%s0 + $0x20] sm:$0xf]
  %v47 = vld [vmem:[%s0 + $0x24] sm:$0xf]
  %v48 = vld [vmem:[%s0 + $0x28] sm:$0xf]
  %v49 = vld [vmem:[%s0 + $0x2c] sm:$0xf]
  %v50 = vld [vmem:[%s0 + $0x30] sm:$0xf]
  %v51 = vld [vmem:[%s0 + $0x34] sm:$0xf]
  %v52 = vld [vmem:[%s0 + $0x38] sm:$0xf]
  %v53 = vld [vmem:[%s0 + $0x3c] sm:$0xf]
  %v70 = vunpack.c.l.b16 %v38
  %v71 = vunpack.c.l.b16 %v39
  %v72 = vunpack.c.l.b16 %v40
  %v73 = vunpack.c.l.b16 %v41
  %v74 = vunpack.c.l.b16 %v42
  %v75 = vunpack.c.l.b16 %v43
  %v76 = vunpack.c.l.b16 %v44
  %v77 = vunpack.c.l.b16 %v45
  %v78 = vunpack.c.l.b16 %v46
  %v79 = vunpack.c.l.b16 %v47
  %v80 = vunpack.c.l.b16 %v48
  %v81 = vunpack.c.l.b16 %v49
  %v82 = vunpack.c.l.b16 %v50
  %v83 = vunpack.c.l.b16 %v51
  %v84 = vunpack.c.l.b16 %v52
  %v85 = vunpack.c.l.b16 %v53
  %v86 = vpack.c.b16 %v71, %v70
  %v87 = vpack.c.b16 %v73, %v72
  %v88 = vpack.c.b16 %v75, %v74
  %v89 = vpack.c.b16 %v77, %v76
  %v90 = vpack.c.b16 %v79, %v78
  %v91 = vpack.c.b16 %v81, %v80
  %v92 = vpack.c.b16 %v83, %v82
  %v93 = vpack.c.b16 %v85, %v84
  %vm102 = vcmask 523264
  %103 = vst.msk [vmem:[#allocation2] sm:$0xff] %vm102, %v86
  %104 = vst.msk [vmem:[#allocation2 + $0x8] sm:$0xff] %vm102, %v87
  %105 = vst.msk [vmem:[#allocation2 + $0x10] sm:$0xff] %vm102, %v88
  %106 = vst.msk [vmem:[#allocation2 + $0x18] sm:$0xff] %vm102, %v89
  %107 = vst.msk [vmem:[#allocation2 + $0x20] sm:$0xff] %vm102, %v90
  %108 = vst.msk [vmem:[#allocation2 + $0x28] sm:$0xff] %vm102, %v91
  %109 = vst.msk [vmem:[#allocation2 + $0x30] sm:$0xff] %vm102, %v92
  %110 = vst.msk [vmem:[#allocation2 + $0x38] sm:$0xff] %vm102, %v93
  %v111 = vld [vmem:[%s1] sm:$0xf]
  %v112 = vld [vmem:[%s1 + $0x4] sm:$0xf]
  %v113 = vld [vmem:[%s1 + $0x8] sm:$0xf]
  %v114 = vld [vmem:[%s1 + $0xc] sm:$0xf]
  %v115 = vld [vmem:[%s1 + $0x10] sm:$0xf]
  %v116 = vld [vmem:[%s1 + $0x14] sm:$0xf]
  %v117 = vld [vmem:[%s1 + $0x18] sm:$0xf]
  %v118 = vld [vmem:[%s1 + $0x1c] sm:$0xf]
  %v119 = vld [vmem:[%s1 + $0x20] sm:$0xf]
  %v120 = vld [vmem:[%s1 + $0x24] sm:$0xf]
  %v121 = vld [vmem:[%s1 + $0x28] sm:$0xf]
  %v122 = vld [vmem:[%s1 + $0x2c] sm:$0xf]
  %v123 = vld [vmem:[%s1 + $0x30] sm:$0xf]
  %v124 = vld [vmem:[%s1 + $0x34] sm:$0xf]
  %v125 = vld [vmem:[%s1 + $0x38] sm:$0xf]
  %v126 = vld [vmem:[%s1 + $0x3c] sm:$0xf]
  %v143 = vunpack.c.l.b16 %v111
  %v144 = vunpack.c.l.b16 %v112
  %v145 = vunpack.c.l.b16 %v113
  %v146 = vunpack.c.l.b16 %v114
  %v147 = vunpack.c.l.b16 %v115
  %v148 = vunpack.c.l.b16 %v116
  %v149 = vunpack.c.l.b16 %v117
  %v150 = vunpack.c.l.b16 %v118
  %v151 = vunpack.c.l.b16 %v119
  %v152 = vunpack.c.l.b16 %v120
  %v153 = vunpack.c.l.b16 %v121
  %v154 = vunpack.c.l.b16 %v122
  %v155 = vunpack.c.l.b16 %v123
  %v156 = vunpack.c.l.b16 %v124
  %v157 = vunpack.c.l.b16 %v125
  %v158 = vunpack.c.l.b16 %v126
  %v159 = vpack.c.b16 %v144, %v143
  %v160 = vpack.c.b16 %v146, %v145
  %v161 = vpack.c.b16 %v148, %v147
  %v162 = vpack.c.b16 %v150, %v149
  %v163 = vpack.c.b16 %v152, %v151
  %v164 = vpack.c.b16 %v154, %v153
  %v165 = vpack.c.b16 %v156, %v155
  %v166 = vpack.c.b16 %v158, %v157
  %167 = vrot.lane.b32.xlu0 %v159, 64
  %v168 = vpop.permute.xlu0 %167
  %169 = vrot.lane.b32.xlu0 %v160, 64
  %v170 = vpop.permute.xlu0 %169
  %171 = vrot.lane.b32.xlu0 %v161, 64
  %v172 = vpop.permute.xlu0 %171
  %173 = vrot.lane.b32.xlu0 %v162, 64
  %v174 = vpop.permute.xlu0 %173
  %175 = vrot.lane.b32.xlu0 %v163, 64
  %v176 = vpop.permute.xlu0 %175
  %177 = vrot.lane.b32.xlu0 %v164, 64
  %v178 = vpop.permute.xlu0 %177
  %179 = vrot.lane.b32.xlu0 %v165, 64
  %v180 = vpop.permute.xlu0 %179
  %181 = vrot.lane.b32.xlu0 %v166, 64
  %v182 = vpop.permute.xlu0 %181
  %vm191 = vcmask 1048064
  %192 = vst.msk [vmem:[#allocation2] sm:$0xff] %vm191, %v168
  %193 = vst.msk [vmem:[#allocation2 + $0x8] sm:$0xff] %vm191, %v170
  %194 = vst.msk [vmem:[#allocation2 + $0x10] sm:$0xff] %vm191, %v172
  %195 = vst.msk [vmem:[#allocation2 + $0x18] sm:$0xff] %vm191, %v174
  %196 = vst.msk [vmem:[#allocation2 + $0x20] sm:$0xff] %vm191, %v176
  %197 = vst.msk [vmem:[#allocation2 + $0x28] sm:$0xff] %vm191, %v178
  %198 = vst.msk [vmem:[#allocation2 + $0x30] sm:$0xff] %vm191, %v180
  %199 = vst.msk [vmem:[#allocation2 + $0x38] sm:$0xff] %vm191, %v182
  %v200 = vld [vmem:[#allocation2] sm:$0xff]
  %v201 = vld [vmem:[#allocation2 + $0x8] sm:$0xff]
  %v202 = vld [vmem:[#allocation2 + $0x10] sm:$0xff]
  %v203 = vld [vmem:[#allocation2 + $0x18] sm:$0xff]
  %v204 = vld [vmem:[#allocation2 + $0x20] sm:$0xff]
  %v205 = vld [vmem:[#allocation2 + $0x28] sm:$0xff]
  %v206 = vld [vmem:[#allocation2 + $0x30] sm:$0xff]
  %v207 = vld [vmem:[#allocation2 + $0x38] sm:$0xff]
  %v208 = vld [vmem:[%s2] sm:$0xf]
  %v209 = vld [vmem:[%s2 + $0x4] sm:$0xf]
  %v210 = vld [vmem:[%s2 + $0x8] sm:$0xf]
  %v211 = vld [vmem:[%s2 + $0xc] sm:$0xf]
  %v212 = vld [vmem:[%s2 + $0x10] sm:$0xf]
  %v213 = vld [vmem:[%s2 + $0x14] sm:$0xf]
  %v214 = vld [vmem:[%s2 + $0x18] sm:$0xf]
  %v215 = vld [vmem:[%s2 + $0x1c] sm:$0xf]
  %v216 = vld [vmem:[%s2 + $0x20] sm:$0xf]
  %v217 = vld [vmem:[%s2 + $0x24] sm:$0xf]
  %v218 = vld [vmem:[%s2 + $0x28] sm:$0xf]
  %v219 = vld [vmem:[%s2 + $0x2c] sm:$0xf]
  %v220 = vld [vmem:[%s2 + $0x30] sm:$0xf]
  %v221 = vld [vmem:[%s2 + $0x34] sm:$0xf]
  %v222 = vld [vmem:[%s2 + $0x38] sm:$0xf]
  %v223 = vld [vmem:[%s2 + $0x3c] sm:$0xf]
  %v240 = vunpack.c.l.b16 %v208
  %v241 = vunpack.c.l.b16 %v209
  %v242 = vunpack.c.l.b16 %v210
  %v243 = vunpack.c.l.b16 %v211
  %v244 = vunpack.c.l.b16 %v212
  %v245 = vunpack.c.l.b16 %v213
  %v246 = vunpack.c.l.b16 %v214
  %v247 = vunpack.c.l.b16 %v215
  %v248 = vunpack.c.l.b16 %v216
  %v249 = vunpack.c.l.b16 %v217
  %v250 = vunpack.c.l.b16 %v218
  %v251 = vunpack.c.l.b16 %v219
  %v252 = vunpack.c.l.b16 %v220
  %v253 = vunpack.c.l.b16 %v221
  %v254 = vunpack.c.l.b16 %v222
  %v255 = vunpack.c.l.b16 %v223
  %v256 = vpack.c.b16 %v241, %v240
  %v257 = vpack.c.b16 %v243, %v242
  %v258 = vpack.c.b16 %v245, %v244
  %v259 = vpack.c.b16 %v247, %v246
  %v260 = vpack.c.b16 %v249, %v248
  %v261 = vpack.c.b16 %v251, %v250
  %v262 = vpack.c.b16 %v253, %v252
  %v263 = vpack.c.b16 %v255, %v254
  %272 = vmatprep.subr.bf16.mxu0 0
  %273 = vmatpush1.bf16.msra.mxu0 %v256
  %274 = vmatprep.subr.bf16.mxu0 0
  %275 = vmatpush1.bf16.msra.mxu0 %v257
  %276 = vmatprep.subr.bf16.mxu0 0
  %277 = vmatpush1.bf16.msra.mxu0 %v258
  %278 = vmatprep.subr.bf16.mxu0 0
  %279 = vmatpush1.bf16.msra.mxu0 %v259
  %280 = vmatprep.subr.bf16.mxu0 0
  %281 = vmatpush1.bf16.msra.mxu0 %v260
  %282 = vmatprep.subr.bf16.mxu0 0
  %283 = vmatpush1.bf16.msra.mxu0 %v261
  %284 = vmatprep.subr.bf16.mxu0 0
  %285 = vmatpush1.bf16.msra.mxu0 %v262
  %286 = vmatprep.subr.bf16.mxu0 0
  %287 = vmatpush1.bf16.msra.mxu0 %v263
  %288 = vmatprep.subr.bf16.mxu0 0
  %289 = vmatpush1.bf16.msra.mxu0 0
  %290 = vmatprep.subr.bf16.mxu0 0
  %291 = vmatpush1.bf16.msra.mxu0 0
  %292 = vmatprep.subr.bf16.mxu0 0
  %293 = vmatpush1.bf16.msra.mxu0 0
  %294 = vmatprep.subr.bf16.mxu0 0
  %295 = vmatpush1.bf16.msra.mxu0 0
  %296 = vmatprep.subr.bf16.mxu0 0
  %297 = vmatpush1.bf16.msra.mxu0 0
  %298 = vmatprep.subr.bf16.mxu0 0
  %299 = vmatpush1.bf16.msra.mxu0 0
  %300 = vmatprep.subr.bf16.mxu0 0
  %301 = vmatpush1.bf16.msra.mxu0 0
  %302 = vmatprep.subr.bf16.mxu0 0
  %303 = vmatpush1.bf16.msra.mxu0 0
  %304 = vmatprep.mubr.bf16.mxu0 0
  %305 = vmatmul.mubr.bf16.gmra.mrb[0].mxu0 %v200
  %v306 = vpop.f32.mrb[0].mxu0
  %v307 = vadd.f32 0.0, %v306
  %v308 = vpop.f32.mrb[0].mxu0
  %v309 = vpop.f32.mrb[0].mxu0
  %v310 = vadd.f32 0.0, %v309
  %v311 = vpop.f32.mrb[0].mxu0
  %312 = vmatprep.mubr.bf16.mxu0 0
  %313 = vmatmul.mubr.bf16.gmra.mrb[0].mxu0 %v201
  %v314 = vpop.f32.mrb[0].mxu0
  %v315 = vadd.f32 0.0, %v314
  %v316 = vpop.f32.mrb[0].mxu0
  %v317 = vpop.f32.mrb[0].mxu0
  %v318 = vadd.f32 0.0, %v317
  %v319 = vpop.f32.mrb[0].mxu0
  %320 = vmatprep.mubr.bf16.mxu0 0
  %321 = vmatmul.mubr.bf16.gmra.mrb[0].mxu0 %v202
  %v322 = vpop.f32.mrb[0].mxu0
  %v323 = vadd.f32 0.0, %v322
  %v324 = vpop.f32.mrb[0].mxu0
  %v325 = vpop.f32.mrb[0].mxu0
  %v326 = vadd.f32 0.0, %v325
  %v327 = vpop.f32.mrb[0].mxu0
  %328 = vmatprep.mubr.bf16.mxu0 0
  %329 = vmatmul.mubr.bf16.gmra.mrb[0].mxu0 %v203
  %v330 = vpop.f32.mrb[0].mxu0
  %v331 = vadd.f32 0.0, %v330
  %v332 = vpop.f32.mrb[0].mxu0
  %v333 = vpop.f32.mrb[0].mxu0
  %v334 = vadd.f32 0.0, %v333
  %v335 = vpop.f32.mrb[0].mxu0
  %336 = vmatprep.mubr.bf16.mxu0 0
  %337 = vmatmul.mubr.bf16.gmra.mrb[0].mxu0 %v204
  %v338 = vpop.f32.mrb[0].mxu0
  %v339 = vadd.f32 0.0, %v338
  %v340 = vpop.f32.mrb[0].mxu0
  %v341 = vpop.f32.mrb[0].mxu0
  %v342 = vadd.f32 0.0, %v341
  %v343 = vpop.f32.mrb[0].mxu0
  %344 = vmatprep.mubr.bf16.mxu0 0
  %345 = vmatmul.mubr.bf16.gmra.mrb[0].mxu0 %v205
  %v346 = vpop.f32.mrb[0].mxu0
  %v347 = vadd.f32 0.0, %v346
  %v348 = vpop.f32.mrb[0].mxu0
  %v349 = vpop.f32.mrb[0].mxu0
  %v350 = vadd.f32 0.0, %v349
  %v351 = vpop.f32.mrb[0].mxu0
  %352 = vmatprep.mubr.bf16.mxu0 0
  %353 = vmatmul.mubr.bf16.gmra.mrb[0].mxu0 %v206
  %v354 = vpop.f32.mrb[0].mxu0
  %v355 = vadd.f32 0.0, %v354
  %v356 = vpop.f32.mrb[0].mxu0
  %v357 = vpop.f32.mrb[0].mxu0
  %v358 = vadd.f32 0.0, %v357
  %v359 = vpop.f32.mrb[0].mxu0
  %360 = vmatprep.mubr.bf16.mxu0 0
  %361 = vmatmul.mubr.bf16.gmra.mrb[0].mxu0 %v207
  %v362 = vpop.f32.mrb[0].mxu0
  %v363 = vadd.f32 0.0, %v362
  %v364 = vpop.f32.mrb[0].mxu0
  %v365 = vpop.f32.mrb[0].mxu0
  %v366 = vadd.f32 0.0, %v365
  %v367 = vpop.f32.mrb[0].mxu0
  %368 = vdwg.mxu0
  %v369 = vsel %vm102, %v307, 0.0
  %v370 = vsel %vm102, %v310, 0.0
  %v371 = vadd.f32 %v369, %v370
  %v372 = vsel %vm102, %v315, 0.0
  %v373 = vadd.f32 %v371, %v372
  %v374 = vsel %vm102, %v318, 0.0
  %v375 = vadd.f32 %v373, %v374
  %v376 = vsel %vm102, %v323, 0.0
  %v377 = vadd.f32 %v375, %v376
  %v378 = vsel %vm102, %v326, 0.0
  %v379 = vadd.f32 %v377, %v378
  %v380 = vsel %vm102, %v331, 0.0
  %v381 = vadd.f32 %v379, %v380
  %v382 = vsel %vm102, %v334, 0.0
  %v383 = vadd.f32 %v381, %v382
  %v384 = vsel %vm102, %v339, 0.0
  %v385 = vadd.f32 %v383, %v384
  %v386 = vsel %vm102, %v342, 0.0
  %v387 = vadd.f32 %v385, %v386
  %v388 = vsel %vm102, %v347, 0.0
  %v389 = vadd.f32 %v387, %v388
  %v390 = vsel %vm102, %v350, 0.0
  %v391 = vadd.f32 %v389, %v390
  %v392 = vsel %vm102, %v355, 0.0
  %v393 = vadd.f32 %v391, %v392
  %v394 = vsel %vm102, %v358, 0.0
  %v395 = vadd.f32 %v393, %v394
  %v396 = vsel %vm102, %v363, 0.0
  %v397 = vadd.f32 %v395, %v396
  %v398 = vsel %vm102, %v366, 0.0
  %v399 = vadd.f32 %v397, %v398
  %v400 = vrot.slane %v399, 4
  %v401 = vadd.f32 %v399, %v400
  %v402 = vrot.slane %v401, 2
  %v403 = vadd.f32 %v401, %v402
  %v404 = vrot.slane %v403, 1
  %v405 = vadd.f32 %v403, %v404
  %v406 = vrcp.pop 128.0
  %v407 = vmul.f32 %v405, %v406
  %v408 = vsub.f32 %v307, %v407
  %v409 = vsub.f32 %v310, %v407
  %v410 = vsub.f32 %v315, %v407
  %v411 = vsub.f32 %v318, %v407
  %v412 = vsub.f32 %v323, %v407
  %v413 = vsub.f32 %v326, %v407
  %v414 = vsub.f32 %v331, %v407
  %v415 = vsub.f32 %v334, %v407
  %v416 = vsub.f32 %v339, %v407
  %v417 = vsub.f32 %v342, %v407
  %v418 = vsub.f32 %v347, %v407
  %v419 = vsub.f32 %v350, %v407
  %v420 = vsub.f32 %v355, %v407
  %v421 = vsub.f32 %v358, %v407
  %v422 = vsub.f32 %v363, %v407
  %v423 = vsub.f32 %v366, %v407
  %v424 = vmul.f32 %v408, %v408
  %v425 = vmul.f32 %v409, %v409
  %v426 = vmul.f32 %v410, %v410
  %v427 = vmul.f32 %v411, %v411
  %v428 = vmul.f32 %v412, %v412
  %v429 = vmul.f32 %v413, %v413
  %v430 = vmul.f32 %v414, %v414
  %v431 = vmul.f32 %v415, %v415
  %v432 = vmul.f32 %v416, %v416
  %v433 = vmul.f32 %v417, %v417
  %v434 = vmul.f32 %v418, %v418
  %v435 = vmul.f32 %v419, %v419
  %v436 = vmul.f32 %v420, %v420
  %v437 = vmul.f32 %v421, %v421
  %v438 = vmul.f32 %v422, %v422
  %v439 = vmul.f32 %v423, %v423
  %v440 = vsel %vm102, %v424, 0.0
  %v441 = vsel %vm102, %v425, 0.0
  %v442 = vadd.f32 %v440, %v441
  %v443 = vsel %vm102, %v426, 0.0
  %v444 = vadd.f32 %v442, %v443
  %v445 = vsel %vm102, %v427, 0.0
  %v446 = vadd.f32 %v444, %v445
  %v447 = vsel %vm102, %v428, 0.0
  %v448 = vadd.f32 %v446, %v447
  %v449 = vsel %vm102, %v429, 0.0
  %v450 = vadd.f32 %v448, %v449
  %v451 = vsel %vm102, %v430, 0.0
  %v452 = vadd.f32 %v450, %v451
  %v453 = vsel %vm102, %v431, 0.0
  %v454 = vadd.f32 %v452, %v453
  %v455 = vsel %vm102, %v432, 0.0
  %v456 = vadd.f32 %v454, %v455
  %v457 = vsel %vm102, %v433, 0.0
  %v458 = vadd.f32 %v456, %v457
  %v459 = vsel %vm102, %v434, 0.0
  %v460 = vadd.f32 %v458, %v459
  %v461 = vsel %vm102, %v435, 0.0
  %v462 = vadd.f32 %v460, %v461
  %v463 = vsel %vm102, %v436, 0.0
  %v464 = vadd.f32 %v462, %v463
  %v465 = vsel %vm102, %v437, 0.0
  %v466 = vadd.f32 %v464, %v465
  %v467 = vsel %vm102, %v438, 0.0
  %v468 = vadd.f32 %v466, %v467
  %v469 = vsel %vm102, %v439, 0.0
  %v470 = vadd.f32 %v468, %v469
  %v471 = vrot.slane %v470, 4
  %v472 = vadd.f32 %v470, %v471
  %v473 = vrot.slane %v472, 2
  %v474 = vadd.f32 %v472, %v473
  %v475 = vrot.slane %v474, 1
  %v476 = vadd.f32 %v474, %v475
  %v477 = vmul.f32 %v476, %v406
  %v478 = vld [vmem:[%s4] sm:$0x1]
  %v480 = vlaneseq
  %v481 = vshrl.u32 %v480, 7
  %v482 = vsub.s32 0, %v481
  %v483 = vrot.slane %v478, %v482
  %v485 = vmul.f32 %v483, %v408
  %v486 = vmul.f32 %v483, %v409
  %v487 = vmul.f32 %v483, %v410
  %v488 = vmul.f32 %v483, %v411
  %v489 = vmul.f32 %v483, %v412
  %v490 = vmul.f32 %v483, %v413
  %v491 = vmul.f32 %v483, %v414
  %v492 = vmul.f32 %v483, %v415
  %v493 = vmul.f32 %v483, %v416
  %v494 = vmul.f32 %v483, %v417
  %v495 = vmul.f32 %v483, %v418
  %v496 = vmul.f32 %v483, %v419
  %v497 = vmul.f32 %v483, %v420
  %v498 = vmul.f32 %v483, %v421
  %v499 = vmul.f32 %v483, %v422
  %v500 = vmul.f32 %v483, %v423
  %v501 = vadd.f32 %v477, 1e-05
  %v502 = vrsqrt.pop %v501
  %v503 = vmul.f32 %v485, %v502
  %v504 = vmul.f32 %v486, %v502
  %v505 = vmul.f32 %v487, %v502
  %v506 = vmul.f32 %v488, %v502
  %v507 = vmul.f32 %v489, %v502
  %v508 = vmul.f32 %v490, %v502
  %v509 = vmul.f32 %v491, %v502
  %v510 = vmul.f32 %v492, %v502
  %v511 = vmul.f32 %v493, %v502
  %v512 = vmul.f32 %v494, %v502
  %v513 = vmul.f32 %v495, %v502
  %v514 = vmul.f32 %v496, %v502
  %v515 = vmul.f32 %v497, %v502
  %v516 = vmul.f32 %v498, %v502
  %v517 = vmul.f32 %v499, %v502
  %v518 = vmul.f32 %v500, %v502
  %v519 = vld [vmem:[%s5] sm:$0x1]
  %v521 = vlaneseq
  %v522 = vshrl.u32 %v521, 7
  %v523 = vsub.s32 0, %v522
  %v524 = vrot.slane %v519, %v523
  %v526 = vadd.f32 %v503, %v524
  %v527 = vadd.f32 %v504, %v524
  %v528 = vadd.f32 %v505, %v524
  %v529 = vadd.f32 %v506, %v524
  %v530 = vadd.f32 %v507, %v524
  %v531 = vadd.f32 %v508, %v524
  %v532 = vadd.f32 %v509, %v524
  %v533 = vadd.f32 %v510, %v524
  %v534 = vadd.f32 %v511, %v524
  %v535 = vadd.f32 %v512, %v524
  %v536 = vadd.f32 %v513, %v524
  %v537 = vadd.f32 %v514, %v524
  %v538 = vadd.f32 %v515, %v524
  %v539 = vadd.f32 %v516, %v524
  %v540 = vadd.f32 %v517, %v524
  %v541 = vadd.f32 %v518, %v524
  %v542 = vmax.f32 %v526, 0.0
  %v543 = vmax.f32 %v527, 0.0
  %v544 = vmax.f32 %v528, 0.0
  %v545 = vmax.f32 %v529, 0.0
  %v546 = vmax.f32 %v530, 0.0
  %v547 = vmax.f32 %v531, 0.0
  %v548 = vmax.f32 %v532, 0.0
  %v549 = vmax.f32 %v533, 0.0
  %v550 = vmax.f32 %v534, 0.0
  %v551 = vmax.f32 %v535, 0.0
  %v552 = vmax.f32 %v536, 0.0
  %v553 = vmax.f32 %v537, 0.0
  %v554 = vmax.f32 %v538, 0.0
  %v555 = vmax.f32 %v539, 0.0
  %v556 = vmax.f32 %v540, 0.0
  %v557 = vmax.f32 %v541, 0.0
  %v558 = vpack.c.bf16 %v543, %v542
  %v559 = vpack.c.bf16 %v545, %v544
  %v560 = vpack.c.bf16 %v547, %v546
  %v561 = vpack.c.bf16 %v549, %v548
  %v562 = vpack.c.bf16 %v551, %v550
  %v563 = vpack.c.bf16 %v553, %v552
  %v564 = vpack.c.bf16 %v555, %v554
  %v565 = vpack.c.bf16 %v557, %v556
  %v566 = vld [vmem:[%s3] sm:$0xf]
  %v567 = vld [vmem:[%s3 + $0x4] sm:$0xf]
  %v568 = vld [vmem:[%s3 + $0x8] sm:$0xf]
  %v569 = vld [vmem:[%s3 + $0xc] sm:$0xf]
  %v570 = vld [vmem:[%s3 + $0x10] sm:$0xf]
  %v571 = vld [vmem:[%s3 + $0x14] sm:$0xf]
  %v572 = vld [vmem:[%s3 + $0x18] sm:$0xf]
  %v573 = vld [vmem:[%s3 + $0x1c] sm:$0xf]
  %v582 = vunpack.c.l.b16 %v566
  %v583 = vunpack.c.l.b16 %v567
  %v584 = vunpack.c.l.b16 %v568
  %v585 = vunpack.c.l.b16 %v569
  %v586 = vunpack.c.l.b16 %v570
  %v587 = vunpack.c.l.b16 %v571
  %v588 = vunpack.c.l.b16 %v572
  %v589 = vunpack.c.l.b16 %v573
  %v590 = vpack.c.b16 %v583, %v582
  %v591 = vpack.c.b16 %v585, %v584
  %v592 = vpack.c.b16 %v587, %v586
  %v593 = vpack.c.b16 %v589, %v588
  %v599 = vsel %vm102, %v558, 0
  %v602 = vsel %vm102, %v559, 0
  %v605 = vsel %vm102, %v560, 0
  %v608 = vsel %vm102, %v561, 0
  %v611 = vsel %vm102, %v562, 0
  %v614 = vsel %vm102, %v563, 0
  %v617 = vsel %vm102, %v564, 0
  %v620 = vsel %vm102, %v565, 0
  %622 = vmatprep.subr.bf16.mxu0 0
  %623 = vmatpush1.bf16.msra.mxu0 %v590
  %624 = vmatprep.subr.bf16.mxu0 0
  %625 = vmatpush1.bf16.msra.mxu0 %v591
  %626 = vmatprep.subr.bf16.mxu0 0
  %627 = vmatpush1.bf16.msra.mxu0 %v592
  %628 = vmatprep.subr.bf16.mxu0 0
  %629 = vmatpush1.bf16.msra.mxu0 %v593
  %630 = vmatprep.subr.bf16.mxu0 0
  %631 = vmatpush1.bf16.msra.mxu0 0
  %632 = vmatprep.subr.bf16.mxu0 0
  %633 = vmatpush1.bf16.msra.mxu0 0
  %634 = vmatprep.subr.bf16.mxu0 0
  %635 = vmatpush1.bf16.msra.mxu0 0
  %636 = vmatprep.subr.bf16.mxu0 0
  %637 = vmatpush1.bf16.msra.mxu0 0
  %638 = vmatprep.subr.bf16.mxu0 0
  %639 = vmatpush1.bf16.msra.mxu0 0
  %640 = vmatprep.subr.bf16.mxu0 0
  %641 = vmatpush1.bf16.msra.mxu0 0
  %642 = vmatprep.subr.bf16.mxu0 0
  %643 = vmatpush1.bf16.msra.mxu0 0
  %644 = vmatprep.subr.bf16.mxu0 0
  %645 = vmatpush1.bf16.msra.mxu0 0
  %646 = vmatprep.subr.bf16.mxu0 0
  %647 = vmatpush1.bf16.msra.mxu0 0
  %648 = vmatprep.subr.bf16.mxu0 0
  %649 = vmatpush1.bf16.msra.mxu0 0
  %650 = vmatprep.subr.bf16.mxu0 0
  %651 = vmatpush1.bf16.msra.mxu0 0
  %652 = vmatprep.subr.bf16.mxu0 0
  %653 = vmatpush1.bf16.msra.mxu0 0
  %654 = vmatprep.mubr.bf16.mxu0 0
  %655 = vmatmul.mubr.bf16.gmra.mrb[0].mxu0 %v599
  %v656 = vpop.f32.mrb[0].mxu0
  %v657 = vadd.f32 0.0, %v656
  %v658 = vpop.f32.mrb[0].mxu0
  %v659 = vpop.f32.mrb[0].mxu0
  %v660 = vadd.f32 0.0, %v659
  %v661 = vpop.f32.mrb[0].mxu0
  %662 = vmatprep.mubr.bf16.mxu0 0
  %663 = vmatmul.mubr.bf16.gmra.mrb[0].mxu0 %v602
  %v664 = vpop.f32.mrb[0].mxu0
  %v665 = vadd.f32 0.0, %v664
  %v666 = vpop.f32.mrb[0].mxu0
  %v667 = vpop.f32.mrb[0].mxu0
  %v668 = vadd.f32 0.0, %v667
  %v669 = vpop.f32.mrb[0].mxu0
  %670 = vmatprep.mubr.bf16.mxu0 0
  %671 = vmatmul.mubr.bf16.gmra.mrb[0].mxu0 %v605
  %v672 = vpop.f32.mrb[0].mxu0
  %v673 = vadd.f32 0.0, %v672
  %v674 = vpop.f32.mrb[0].mxu0
  %v675 = vpop.f32.mrb[0].mxu0
  %v676 = vadd.f32 0.0, %v675
  %v677 = vpop.f32.mrb[0].mxu0
  %678 = vmatprep.mubr.bf16.mxu0 0
  %679 = vmatmul.mubr.bf16.gmra.mrb[0].mxu0 %v608
  %v680 = vpop.f32.mrb[0].mxu0
  %v681 = vadd.f32 0.0, %v680
  %v682 = vpop.f32.mrb[0].mxu0
  %v683 = vpop.f32.mrb[0].mxu0
  %v684 = vadd.f32 0.0, %v683
  %v685 = vpop.f32.mrb[0].mxu0
  %686 = vmatprep.mubr.bf16.mxu0 0
  %687 = vmatmul.mubr.bf16.gmra.mrb[0].mxu0 %v611
  %v688 = vpop.f32.mrb[0].mxu0
  %v689 = vadd.f32 0.0, %v688
  %v690 = vpop.f32.mrb[0].mxu0
  %v691 = vpop.f32.mrb[0].mxu0
  %v692 = vadd.f32 0.0, %v691
  %v693 = vpop.f32.mrb[0].mxu0
  %694 = vmatprep.mubr.bf16.mxu0 0
  %695 = vmatmul.mubr.bf16.gmra.mrb[0].mxu0 %v614
  %v696 = vpop.f32.mrb[0].mxu0
  %v697 = vadd.f32 0.0, %v696
  %v698 = vpop.f32.mrb[0].mxu0
  %v699 = vpop.f32.mrb[0].mxu0
  %v700 = vadd.f32 0.0, %v699
  %v701 = vpop.f32.mrb[0].mxu0
  %702 = vmatprep.mubr.bf16.mxu0 0
  %703 = vmatmul.mubr.bf16.gmra.mrb[0].mxu0 %v617
  %v704 = vpop.f32.mrb[0].mxu0
  %v705 = vadd.f32 0.0, %v704
  %v706 = vpop.f32.mrb[0].mxu0
  %v707 = vpop.f32.mrb[0].mxu0
  %v708 = vadd.f32 0.0, %v707
  %v709 = vpop.f32.mrb[0].mxu0
  %710 = vmatprep.mubr.bf16.mxu0 0
  %711 = vmatmul.mubr.bf16.gmra.mrb[0].mxu0 %v620
  %v712 = vpop.f32.mrb[0].mxu0
  %v713 = vadd.f32 0.0, %v712
  %v714 = vpop.f32.mrb[0].mxu0
  %v715 = vpop.f32.mrb[0].mxu0
  %v716 = vadd.f32 0.0, %v715
  %v717 = vpop.f32.mrb[0].mxu0
  %718 = vdwg.mxu0
  %vm719 = vcmask 261120
  %v720 = vsel %vm719, %v657, 0.0
  %v721 = vsel %vm719, %v660, 0.0
  %v722 = vadd.f32 %v720, %v721
  %v723 = vsel %vm719, %v665, 0.0
  %v724 = vadd.f32 %v722, %v723
  %v725 = vsel %vm719, %v668, 0.0
  %v726 = vadd.f32 %v724, %v725
  %v727 = vsel %vm719, %v673, 0.0
  %v728 = vadd.f32 %v726, %v727
  %v729 = vsel %vm719, %v676, 0.0
  %v730 = vadd.f32 %v728, %v729
  %v731 = vsel %vm719, %v681, 0.0
  %v732 = vadd.f32 %v730, %v731
  %v733 = vsel %vm719, %v684, 0.0
  %v734 = vadd.f32 %v732, %v733
  %v735 = vsel %vm719, %v689, 0.0
  %v736 = vadd.f32 %v734, %v735
  %v737 = vsel %vm719, %v692, 0.0
  %v738 = vadd.f32 %v736, %v737
  %v739 = vsel %vm719, %v697, 0.0
  %v740 = vadd.f32 %v738, %v739
  %v741 = vsel %vm719, %v700, 0.0
  %v742 = vadd.f32 %v740, %v741
  %v743 = vsel %vm719, %v705, 0.0
  %v744 = vadd.f32 %v742, %v743
  %v745 = vsel %vm719, %v708, 0.0
  %v746 = vadd.f32 %v744, %v745
  %v747 = vsel %vm719, %v713, 0.0
  %v748 = vadd.f32 %v746, %v747
  %v749 = vsel %vm719, %v716, 0.0
  %v750 = vadd.f32 %v748, %v749
  %v751 = vrot.slane %v750, 4
  %v752 = vadd.f32 %v750, %v751
  %v753 = vrot.slane %v752, 2
  %v754 = vadd.f32 %v752, %v753
  %v755 = vrot.slane %v754, 1
  %v756 = vadd.f32 %v754, %v755
  %v757 = vmul.f32 %v756, %v406
  %v758 = vsub.f32 %v657, %v757
  %v759 = vsub.f32 %v660, %v757
  %v760 = vsub.f32 %v665, %v757
  %v761 = vsub.f32 %v668, %v757
  %v762 = vsub.f32 %v673, %v757
  %v763 = vsub.f32 %v676, %v757
  %v764 = vsub.f32 %v681, %v757
  %v765 = vsub.f32 %v684, %v757
  %v766 = vsub.f32 %v689, %v757
  %v767 = vsub.f32 %v692, %v757
  %v768 = vsub.f32 %v697, %v757
  %v769 = vsub.f32 %v700, %v757
  %v770 = vsub.f32 %v705, %v757
  %v771 = vsub.f32 %v708, %v757
  %v772 = vsub.f32 %v713, %v757
  %v773 = vsub.f32 %v716, %v757
  %v774 = vmul.f32 %v758, %v758
  %v775 = vmul.f32 %v759, %v759
  %v776 = vmul.f32 %v760, %v760
  %v777 = vmul.f32 %v761, %v761
  %v778 = vmul.f32 %v762, %v762
  %v779 = vmul.f32 %v763, %v763
  %v780 = vmul.f32 %v764, %v764
  %v781 = vmul.f32 %v765, %v765
  %v782 = vmul.f32 %v766, %v766
  %v783 = vmul.f32 %v767, %v767
  %v784 = vmul.f32 %v768, %v768
  %v785 = vmul.f32 %v769, %v769
  %v786 = vmul.f32 %v770, %v770
  %v787 = vmul.f32 %v771, %v771
  %v788 = vmul.f32 %v772, %v772
  %v789 = vmul.f32 %v773, %v773
  %v790 = vsel %vm719, %v774, 0.0
  %v791 = vsel %vm719, %v775, 0.0
  %v792 = vadd.f32 %v790, %v791
  %v793 = vsel %vm719, %v776, 0.0
  %v794 = vadd.f32 %v792, %v793
  %v795 = vsel %vm719, %v777, 0.0
  %v796 = vadd.f32 %v794, %v795
  %v797 = vsel %vm719, %v778, 0.0
  %v798 = vadd.f32 %v796, %v797
  %v799 = vsel %vm719, %v779, 0.0
  %v800 = vadd.f32 %v798, %v799
  %v801 = vsel %vm719, %v780, 0.0
  %v802 = vadd.f32 %v800, %v801
  %v803 = vsel %vm719, %v781, 0.0
  %v804 = vadd.f32 %v802, %v803
  %v805 = vsel %vm719, %v782, 0.0
  %v806 = vadd.f32 %v804, %v805
  %v807 = vsel %vm719, %v783, 0.0
  %v808 = vadd.f32 %v806, %v807
  %v809 = vsel %vm719, %v784, 0.0
  %v810 = vadd.f32 %v808, %v809
  %v811 = vsel %vm719, %v785, 0.0
  %v812 = vadd.f32 %v810, %v811
  %v813 = vsel %vm719, %v786, 0.0
  %v814 = vadd.f32 %v812, %v813
  %v815 = vsel %vm719, %v787, 0.0
  %v816 = vadd.f32 %v814, %v815
  %v817 = vsel %vm719, %v788, 0.0
  %v818 = vadd.f32 %v816, %v817
  %v819 = vsel %vm719, %v789, 0.0
  %v820 = vadd.f32 %v818, %v819
  %v821 = vrot.slane %v820, 4
  %v822 = vadd.f32 %v820, %v821
  %v823 = vrot.slane %v822, 2
  %v824 = vadd.f32 %v822, %v823
  %v825 = vrot.slane %v824, 1
  %v826 = vadd.f32 %v824, %v825
  %v827 = vmul.f32 %v826, %v406
  %v828 = vld [vmem:[%s6] sm:$0x1]
  %v830 = vlaneseq
  %v831 = vshrl.u32 %v830, 7
  %v832 = vsub.s32 0, %v831
  %v833 = vrot.slane %v828, %v832
  %v835 = vmul.f32 %v833, %v758
  %v836 = vmul.f32 %v833, %v759
  %v837 = vmul.f32 %v833, %v760
  %v838 = vmul.f32 %v833, %v761
  %v839 = vmul.f32 %v833, %v762
  %v840 = vmul.f32 %v833, %v763
  %v841 = vmul.f32 %v833, %v764
  %v842 = vmul.f32 %v833, %v765
  %v843 = vmul.f32 %v833, %v766
  %v844 = vmul.f32 %v833, %v767
  %v845 = vmul.f32 %v833, %v768
  %v846 = vmul.f32 %v833, %v769
  %v847 = vmul.f32 %v833, %v770
  %v848 = vmul.f32 %v833, %v771
  %v849 = vmul.f32 %v833, %v772
  %v850 = vmul.f32 %v833, %v773
  %v851 = vadd.f32 %v827, 1e-05
  %v852 = vrsqrt.pop %v851
  %v853 = vmul.f32 %v835, %v852
  %v854 = vmul.f32 %v836, %v852
  %v855 = vmul.f32 %v837, %v852
  %v856 = vmul.f32 %v838, %v852
  %v857 = vmul.f32 %v839, %v852
  %v858 = vmul.f32 %v840, %v852
  %v859 = vmul.f32 %v841, %v852
  %v860 = vmul.f32 %v842, %v852
  %v861 = vmul.f32 %v843, %v852
  %v862 = vmul.f32 %v844, %v852
  %v863 = vmul.f32 %v845, %v852
  %v864 = vmul.f32 %v846, %v852
  %v865 = vmul.f32 %v847, %v852
  %v866 = vmul.f32 %v848, %v852
  %v867 = vmul.f32 %v849, %v852
  %v868 = vmul.f32 %v850, %v852
  %v869 = vld [vmem:[%s7] sm:$0x1]
  %v871 = vlaneseq
  %v872 = vshrl.u32 %v871, 7
  %v873 = vsub.s32 0, %v872
  %v874 = vrot.slane %v869, %v873
  %v876 = vadd.f32 %v853, %v874
  %v877 = vadd.f32 %v854, %v874
  %v878 = vadd.f32 %v855, %v874
  %v879 = vadd.f32 %v856, %v874
  %v880 = vadd.f32 %v857, %v874
  %v881 = vadd.f32 %v858, %v874
  %v882 = vadd.f32 %v859, %v874
  %v883 = vadd.f32 %v860, %v874
  %v884 = vadd.f32 %v861, %v874
  %v885 = vadd.f32 %v862, %v874
  %v886 = vadd.f32 %v863, %v874
  %v887 = vadd.f32 %v864, %v874
  %v888 = vadd.f32 %v865, %v874
  %v889 = vadd.f32 %v866, %v874
  %v890 = vadd.f32 %v867, %v874
  %v891 = vadd.f32 %v868, %v874
  %v892 = vmax.f32 %v876, 0.0
  %v893 = vmax.f32 %v877, 0.0
  %v894 = vmax.f32 %v878, 0.0
  %v895 = vmax.f32 %v879, 0.0
  %v896 = vmax.f32 %v880, 0.0
  %v897 = vmax.f32 %v881, 0.0
  %v898 = vmax.f32 %v882, 0.0
  %v899 = vmax.f32 %v883, 0.0
  %v900 = vmax.f32 %v884, 0.0
  %v901 = vmax.f32 %v885, 0.0
  %v902 = vmax.f32 %v886, 0.0
  %v903 = vmax.f32 %v887, 0.0
  %v904 = vmax.f32 %v888, 0.0
  %v905 = vmax.f32 %v889, 0.0
  %v906 = vmax.f32 %v890, 0.0
  %v907 = vmax.f32 %v891, 0.0
  %v908 = vld [vmem:[%s8] sm:$0x1]
  %v910 = vlaneseq
  %v911 = vshrl.u32 %v910, 7
  %v912 = vsub.s32 0, %v911
  %v913 = vrot.slane %v908, %v912
  %v915 = vmul.f32 %v892, %v913
  %v916 = vmul.f32 %v893, %v913
  %v917 = vmul.f32 %v894, %v913
  %v918 = vmul.f32 %v895, %v913
  %v919 = vmul.f32 %v896, %v913
  %v920 = vmul.f32 %v897, %v913
  %v921 = vmul.f32 %v898, %v913
  %v922 = vmul.f32 %v899, %v913
  %v923 = vmul.f32 %v900, %v913
  %v924 = vmul.f32 %v901, %v913
  %v925 = vmul.f32 %v902, %v913
  %v926 = vmul.f32 %v903, %v913
  %v927 = vmul.f32 %v904, %v913
  %v928 = vmul.f32 %v905, %v913
  %v929 = vmul.f32 %v906, %v913
  %v930 = vmul.f32 %v907, %v913
  %v931 = vsel %vm719, %v915, 0.0
  %932 = vadd.xlane.f32.xlu0 %v931
  %v933 = vpop.xlane.xlu0 %932
  %v934 = vsel %vm719, %v916, 0.0
  %935 = vadd.xlane.f32.xlu0 %v934
  %v936 = vpop.xlane.xlu0 %935
  %v937 = vsel %vm719, %v917, 0.0
  %938 = vadd.xlane.f32.xlu0 %v937
  %v939 = vpop.xlane.xlu0 %938
  %v940 = vsel %vm719, %v918, 0.0
  %941 = vadd.xlane.f32.xlu0 %v940
  %v942 = vpop.xlane.xlu0 %941
  %v943 = vsel %vm719, %v919, 0.0
  %944 = vadd.xlane.f32.xlu0 %v943
  %v945 = vpop.xlane.xlu0 %944
  %v946 = vsel %vm719, %v920, 0.0
  %947 = vadd.xlane.f32.xlu0 %v946
  %v948 = vpop.xlane.xlu0 %947
  %v949 = vsel %vm719, %v921, 0.0
  %950 = vadd.xlane.f32.xlu0 %v949
  %v951 = vpop.xlane.xlu0 %950
  %v952 = vsel %vm719, %v922, 0.0
  %953 = vadd.xlane.f32.xlu0 %v952
  %v954 = vpop.xlane.xlu0 %953
  %v955 = vsel %vm719, %v923, 0.0
  %956 = vadd.xlane.f32.xlu0 %v955
  %v957 = vpop.xlane.xlu0 %956
  %v958 = vsel %vm719, %v924, 0.0
  %959 = vadd.xlane.f32.xlu0 %v958
  %v960 = vpop.xlane.xlu0 %959
  %v961 = vsel %vm719, %v925, 0.0
  %962 = vadd.xlane.f32.xlu0 %v961
  %v963 = vpop.xlane.xlu0 %962
  %v964 = vsel %vm719, %v926, 0.0
  %965 = vadd.xlane.f32.xlu0 %v964
  %v966 = vpop.xlane.xlu0 %965
  %v967 = vsel %vm719, %v927, 0.0
  %968 = vadd.xlane.f32.xlu0 %v967
  %v969 = vpop.xlane.xlu0 %968
  %v970 = vsel %vm719, %v928, 0.0
  %971 = vadd.xlane.f32.xlu0 %v970
  %v972 = vpop.xlane.xlu0 %971
  %v973 = vsel %vm719, %v929, 0.0
  %974 = vadd.xlane.f32.xlu0 %v973
  %v975 = vpop.xlane.xlu0 %974
  %v976 = vsel %vm719, %v930, 0.0
  %977 = vadd.xlane.f32.xlu0 %v976
  %v978 = vpop.xlane.xlu0 %977
  %v979 = vld [vmem:[#allocation3] sm:$0x1]
  %v981 = vlaneseq
  %v982 = vshrl.u32 %v981, 7
  %v983 = vsub.s32 0, %v982
  %v984 = vrot.slane %v979, %v983
  %v986 = vadd.f32 %v933, %v984
  %v987 = vadd.f32 %v936, %v984
  %v988 = vadd.f32 %v939, %v984
  %v989 = vadd.f32 %v942, %v984
  %v990 = vadd.f32 %v945, %v984
  %v991 = vadd.f32 %v948, %v984
  %v992 = vadd.f32 %v951, %v984
  %v993 = vadd.f32 %v954, %v984
  %v994 = vadd.f32 %v957, %v984
  %v995 = vadd.f32 %v960, %v984
  %v996 = vadd.f32 %v963, %v984
  %v997 = vadd.f32 %v966, %v984
  %v998 = vadd.f32 %v969, %v984
  %v999 = vadd.f32 %v972, %v984
  %v1000 = vadd.f32 %v975, %v984
  %v1001 = vadd.f32 %v978, %v984
  %vm1002 = vcmask 7168
  %1003 = vst.msk [vmem:[%s10] sm:$0xff] %vm1002, %v986
  %1004 = vst.msk [vmem:[%s10 + $0x8] sm:$0xff] %vm1002, %v987
  %1005 = vst.msk [vmem:[%s10 + $0x10] sm:$0xff] %vm1002, %v988
  %1006 = vst.msk [vmem:[%s10 + $0x18] sm:$0xff] %vm1002, %v989
  %1007 = vst.msk [vmem:[%s10 + $0x20] sm:$0xff] %vm1002, %v990
  %1008 = vst.msk [vmem:[%s10 + $0x28] sm:$0xff] %vm1002, %v991
  %1009 = vst.msk [vmem:[%s10 + $0x30] sm:$0xff] %vm1002, %v992
  %1010 = vst.msk [vmem:[%s10 + $0x38] sm:$0xff] %vm1002, %v993
  %1011 = vst.msk [vmem:[%s10 + $0x40] sm:$0xff] %vm1002, %v994
  %1012 = vst.msk [vmem:[%s10 + $0x48] sm:$0xff] %vm1002, %v995
  %1013 = vst.msk [vmem:[%s10 + $0x50] sm:$0xff] %vm1002, %v996
  %1014 = vst.msk [vmem:[%s10 + $0x58] sm:$0xff] %vm1002, %v997
  %1015 = vst.msk [vmem:[%s10 + $0x60] sm:$0xff] %vm1002, %v998
  %1016 = vst.msk [vmem:[%s10 + $0x68] sm:$0xff] %vm1002, %v999
  %1017 = vst.msk [vmem:[%s10 + $0x70] sm:$0xff] %vm1002, %v1000
  %1018 = vst.msk [vmem:[%s10 + $0x78] sm:$0xff] %vm1002, %v1001
  // Predicated region
  $region42: #{tpu_custom_call.1} parent=0 // pred_check
    _
  $region43: #{tpu_custom_call.1} parent=0 // pred_check_branch
    %1020 = sbr.rel (0) target = $region45
  $region44: #{tpu_custom_call.1} parent=0 // pred_region
    _
  $region45: #{tpu_custom_call.1} parent=0 // pred_fallthru
    _
  // Predicated region
  $region46: #{tpu_custom_call.1} parent=0 // pred_check
    _
  $region47: #{tpu_custom_call.1} parent=0 // pred_check_branch
    %1022 = sbr.rel (0) target = $region49
  $region48: #{tpu_custom_call.1} parent=0 // pred_region
    _
  $region49: #{tpu_custom_call.1} parent=0 // pred_fallthru
    _

</llo_original>
